<compile_context>
chip_gen: v7x
topology: tpu7x:2x2x1
jax: 0.10.0
libtpu: 0.0.40
codegen_flags: <defaults>
</compile_context>

<pallas_src>
import functools

import jax
import jax.numpy as jnp
from jax.experimental import pallas as pl
from jax.experimental.pallas import tpu as pltpu


def _prompt_concat_kernel_shared(ctx_ref, prefix_ref, suffix_ref, out_ref):
    """Assemble prompts for a block of CB classes with a shared (generic) ctx.

    Shapes seen per grid step i (over class blocks):
      ctx_ref:    (n_ctx, D)          -- shared context, same block every step
      prefix_ref: (CB, 1, D)
      suffix_ref: (CB, n_suffix, D)
      out_ref:    (CB, total, D)
    """
    cb = out_ref.shape[0]
    n_ctx, d = ctx_ref.shape
    # Broadcast ctx across the class block (== unsqueeze(0).expand in torch).
    ctx_b = jnp.broadcast_to(ctx_ref[...][None, :, :], (cb, n_ctx, d))
    # Build the whole tile in registers, store once (single unmasked vst per
    # vreg row instead of three misaligned sub-block stores).
    full = jnp.concatenate([prefix_ref[...], ctx_b, suffix_ref[...]], axis=1)
    out_ref[...] = full.astype(out_ref.dtype)


def _prompt_concat_kernel_csc(ctx_ref, prefix_ref, suffix_ref, out_ref):
    """Same as above but with class-specific contexts (ctx is per-class).

      ctx_ref:    (CB, n_ctx, D)
      prefix_ref: (CB, 1, D)
      suffix_ref: (CB, n_suffix, D)
      out_ref:    (CB, total, D)
    """
    full = jnp.concatenate([prefix_ref[...], ctx_ref[...], suffix_ref[...]],
                           axis=1)
    out_ref[...] = full.astype(out_ref.dtype)


def _choose_class_block(n_cls, n_ctx, n_suffix, total, ctx_dim, itemsize,
                        ctx_per_class):
    """Size the per-step class block against a double-buffered VMEM budget."""
    per_class_bytes = (1 + n_suffix + total +
                       (n_ctx if ctx_per_class else 0)) * ctx_dim * itemsize
    # ~24 MiB of blocks total with double buffering -> fits the 32 MiB scoped
    # VMEM limit on every generation (v5e/v6e/v7x) with headroom.
    budget_bytes = 24 * 1024 * 1024
    cb = budget_bytes // (2 * per_class_bytes)
    return int(max(1, min(cb, n_cls, 256)))


@functools.partial(jax.jit, static_argnames=("class_block", "out_dtype"))
def prompt_learner_forward(ctx, token_prefix, token_suffix, *,
                           class_block=None, out_dtype=None):
    """Pallas implementation of PromptLearner.forward (class_token_position='end').

    ctx:          (n_ctx, D) generic context, or (n_cls, n_ctx, D) class-specific
    token_prefix: (n_cls, 1, D)
    token_suffix: (n_cls, n_suffix, D)
    returns:      (n_cls, 1 + n_ctx + n_suffix, D) in `out_dtype` (default ctx.dtype)
    """
    csc = ctx.ndim == 3
    n_ctx, ctx_dim = ctx.shape[-2], ctx.shape[-1]
    n_cls = token_prefix.shape[0]
    n_suffix = token_suffix.shape[1]
    total = 1 + n_ctx + n_suffix
    out_dtype = jnp.dtype(out_dtype) if out_dtype is not None else ctx.dtype
    itemsize = jnp.dtype(ctx.dtype).itemsize

    if class_block is None:
        class_block = _choose_class_block(n_cls, n_ctx, n_suffix, total,
                                          ctx_dim, itemsize, csc)
    cb = int(min(class_block, n_cls))
    grid = (pl.cdiv(n_cls, cb),)

    if csc:
        kernel = _prompt_concat_kernel_csc
        ctx_spec = pl.BlockSpec((cb, n_ctx, ctx_dim), lambda i: (i, 0, 0))
    else:
        kernel = _prompt_concat_kernel_shared
        # Shared context: same (full) block every grid step.
        ctx_spec = pl.BlockSpec((n_ctx, ctx_dim), lambda i: (0, 0))

    grid_spec = pltpu.PrefetchScalarGridSpec(
        num_scalar_prefetch=0,
        grid=grid,
        in_specs=[
            ctx_spec,
            pl.BlockSpec((cb, 1, ctx_dim), lambda i: (i, 0, 0)),
            pl.BlockSpec((cb, n_suffix, ctx_dim), lambda i: (i, 0, 0)),
        ],
        out_specs=pl.BlockSpec((cb, total, ctx_dim), lambda i: (i, 0, 0)),
    )

    return pl.pallas_call(
        kernel,
        out_shape=jax.ShapeDtypeStruct((n_cls, total, ctx_dim), out_dtype),
        grid_spec=grid_spec,
        compiler_params=pltpu.CompilerParams(
            dimension_semantics=("parallel",),
            vmem_limit_bytes=32 * 1024 * 1024,
        ),
    )(ctx, token_prefix, token_suffix)


def prompt_learner_reference(ctx, token_prefix, token_suffix):
    """Pure-JAX reference matching the torch forward ('end' position)."""
    n_cls = token_prefix.shape[0]
    if ctx.ndim == 2:
        ctx = jnp.broadcast_to(ctx[None, :, :], (n_cls,) + ctx.shape)
    return jnp.concatenate([token_prefix, ctx, token_suffix], axis=1)


# TODO(synk): class_token_position in {'middle', 'front'} uses per-class
# ragged name_lens splits of the suffix; only the default 'end' position is
# implemented in the Pallas kernel.


if __name__ == "__main__":
    key = jax.random.PRNGKey(0)
    k_ctx, k_pre, k_suf = jax.random.split(key, 3)

    # Small synthetic configuration consistent with the module:
    # n_cls classes, n_ctx context tokens, D embedding dim,
    # total sequence length = 1 (SOS) + n_ctx + n_suffix.
    n_cls, n_ctx, ctx_dim, n_suffix = 16, 4, 128, 11
    dtype = jnp.float32

    # ctx ~ Normal(0, 0.02) as in nn.init.normal_(ctx_vectors, std=0.02)
    ctx = (0.02 * jax.random.normal(k_ctx, (n_ctx, ctx_dim))).astype(dtype)
    # Synthetic token embeddings standing in for
    # clip_model.token_embedding(tokenized_prompts) slices.
    token_prefix = jax.random.normal(k_pre, (n_cls, 1, ctx_dim)).astype(dtype)
    token_suffix = jax.random.normal(k_suf, (n_cls, n_suffix, ctx_dim)).astype(dtype)

    ref = prompt_learner_reference(ctx, token_prefix, token_suffix)

    # 1) Auto-sized class block (whole problem in one grid step here).
    prompts = prompt_learner_forward(ctx, token_prefix, token_suffix)
    prompts = jax.block_until_ready(prompts)
    assert prompts.shape == (n_cls, 1 + n_ctx + n_suffix, ctx_dim)
    assert jnp.allclose(prompts, ref), "Pallas output mismatch (auto block)"

    # 2) Multi-step grid (class_block < n_cls) exercises the coarsened tiling.
    prompts2 = jax.block_until_ready(
        prompt_learner_forward(ctx, token_prefix, token_suffix, class_block=8))
    assert jnp.allclose(prompts2, ref), "Pallas output mismatch (blocked grid)"

    # 3) Class-specific contexts (CSC=True path: ctx is (n_cls, n_ctx, D)).
    ctx_csc = (0.02 * jax.random.normal(k_ctx, (n_cls, n_ctx, ctx_dim))).astype(dtype)
    ref_csc = prompt_learner_reference(ctx_csc, token_prefix, token_suffix)
    prompts3 = jax.block_until_ready(
        prompt_learner_forward(ctx_csc, token_prefix, token_suffix, class_block=8))
    assert jnp.allclose(prompts3, ref_csc), "Pallas output mismatch (CSC)"

    print("KERNEL_OK")
</pallas_src>

<mosaic_0001>
module attributes {stable_mosaic.version = 11 : i64} {
  func.func @_prompt_concat_kernel_shared(%arg0: i32, %arg1: memref<4x128xf32, #tpu.memory_space<vmem>>, %arg2: memref<16x1x128xf32, #tpu.memory_space<vmem>>, %arg3: memref<16x11x128xf32, #tpu.memory_space<vmem>>, %arg4: memref<16x16x128xf32, #tpu.memory_space<vmem>>) attributes {dimension_semantics = [#tpu.dimension_semantics<parallel>], iteration_bounds = array<i64: 1>, scalar_prefetch = 0 : i64, scratch_operands = 0 : i64, tpu.core_type = #tpu.core_type<tc>, window_params = [{pipeline_mode = #tpu.pipeline_mode<synchronous>, transform_indices = @transform_0, window_bounds = array<i64: 4, 128>}, {transform_indices = @transform_1, window_bounds = array<i64: 16, 1, 128>}, {transform_indices = @transform_2, window_bounds = array<i64: 16, 11, 128>}, {transform_indices = @transform_3, window_bounds = array<i64: 16, 16, 128>}]} {
    %c0 = arith.constant 0 : index
    %c0_0 = arith.constant 0 : index
    %0 = vector.load %arg1[%c0, %c0_0] : memref<4x128xf32, #tpu.memory_space<vmem>>, vector<4x128xf32>
    %1 = vector.shape_cast %0 : vector<4x128xf32> to vector<1x4x128xf32>
    %2 = vector.shape_cast %1 : vector<1x4x128xf32> to vector<1x4x128xf32>
    %3 = vector.broadcast %2 : vector<1x4x128xf32> to vector<16x4x128xf32>
    %c0_1 = arith.constant 0 : index
    %c0_2 = arith.constant 0 : index
    %c0_3 = arith.constant 0 : index
    %4 = vector.load %arg2[%c0_1, %c0_2, %c0_3] : memref<16x1x128xf32, #tpu.memory_space<vmem>>, vector<16x1x128xf32>
    %c0_4 = arith.constant 0 : index
    %c0_5 = arith.constant 0 : index
    %c0_6 = arith.constant 0 : index
    %5 = vector.load %arg3[%c0_4, %c0_5, %c0_6] : memref<16x11x128xf32, #tpu.memory_space<vmem>>, vector<16x11x128xf32>
    %6 = tpu.concatenate %4, %3, %5 in 1 : vector<16x1x128xf32>, vector<16x4x128xf32>, vector<16x11x128xf32> -> vector<16x16x128xf32>
    %c0_7 = arith.constant 0 : index
    %c0_8 = arith.constant 0 : index
    %c0_9 = arith.constant 0 : index
    %7 = vector.load %arg4[%c0_7, %c0_8, %c0_9] : memref<16x16x128xf32, #tpu.memory_space<vmem>>, vector<16x16x128xf32>
    tpu.vector_store %arg4[%c0_7, %c0_8, %c0_9], %6 {strides = array<i32>} : memref<16x16x128xf32, #tpu.memory_space<vmem>>, vector<16x16x128xf32>,
    return
  }
  func.func @transform_0(%arg0: i32) -> (i32, i32) {
    %c0_i32 = arith.constant 0 : i32
    %c0_i32_0 = arith.constant 0 : i32
    %c0_i32_1 = arith.constant 0 : i32
    return %c0_i32, %c0_i32_0 : i32, i32
  }
  func.func @transform_1(%arg0: i32) -> (i32, i32, i32) {
    %c0_i32 = arith.constant 0 : i32
    %c0_i32_0 = arith.constant 0 : i32
    %c0_i32_1 = arith.constant 0 : i32
    return %arg0, %c0_i32, %c0_i32_0 : i32, i32, i32
  }
  func.func @transform_2(%arg0: i32) -> (i32, i32, i32) {
    %c0_i32 = arith.constant 0 : i32
    %c0_i32_0 = arith.constant 0 : i32
    %c0_i32_1 = arith.constant 0 : i32
    return %arg0, %c0_i32, %c0_i32_0 : i32, i32, i32
  }
  func.func @transform_3(%arg0: i32) -> (i32, i32, i32) {
    %c0_i32 = arith.constant 0 : i32
    %c0_i32_0 = arith.constant 0 : i32
    %c0_i32_1 = arith.constant 0 : i32
    return %arg0, %c0_i32, %c0_i32_0 : i32, i32, i32
  }
}

</mosaic_0001>

<llo_original>
// kernel: prompt_learner_forward.1
$region0: #{prompt_learner_forward.1}
  #allocation0 [shape = 'u32[]', space=smem, size = 0x4, offset = 0x4, fixed_abs, tag = 'smem constant byte address 0x4 - core index']
  #allocation1 [shape = 'u32[144,128]{1,0:T(1,128)}', space=vmem, size = 0x12000, scoped, tag = 'internal scratch']
  %s0 = inlined_call_operand.vmem [shape: f32[4,128], index: 0, kind: input, shape index: {}]
  %s1 = inlined_call_operand.vmem [shape: f32[16,1,128], index: 1, kind: input, shape index: {}]
  %s2 = inlined_call_operand.vmem [shape: f32[16,11,128], index: 2, kind: input, shape index: {}]
  %s3 = inlined_call_operand.hbm [shape: f32[16,16,128], index: 3, kind: output, shape index: {}]
  %s4 = sld [smem:[#allocation0]]
  $region22: #{prompt_learner_forward.1} parent=0
    _
  %s6 = ssub.s32 1, %s4
  %s7 = scalar_select 0, %s6, %s4
  $region1: #{prompt_learner_forward.1} parent=0
    #allocation2 [shape = 'u8[131072]{0}', space=vmem, size = 0x20000, scoped, tag = 'output window, operand 0, single buffered']
    #allocation3 [shape = 's32[1]{0}', space=sflag, size = 0x4, scoped, tag = 'scoped memory for prompt_learner_forward.1']
    %8 = vsyncpa [#allocation3], 0
    // Predicated region
    $region2: #{prompt_learner_forward.1} parent=1 // pred_check
      _
    $region3: #{prompt_learner_forward.1} parent=1 // pred_check_branch
      %10 = sbr.rel (0) target = $region5
    $region4: #{prompt_learner_forward.1} parent=1 // pred_region
      _
    $region5: #{prompt_learner_forward.1} parent=1 // pred_fallthru
      _
    // Predicated region
    $region6: #{prompt_learner_forward.1} parent=1 // pred_check
      _
    $region7: #{prompt_learner_forward.1} parent=1 // pred_check_branch
      %12 = sbr.rel (0) target = $region9
    $region8: #{prompt_learner_forward.1} parent=1 // pred_region
      _
    $region9: #{prompt_learner_forward.1} parent=1 // pred_fallthru
      _
    // Predicated region
    $region10: #{prompt_learner_forward.1} parent=1 // pred_check
      _
    $region11: #{prompt_learner_forward.1} parent=1 // pred_check_branch
      %14 = sbr.rel (0) target = $region13
    $region12: #{prompt_learner_forward.1} parent=1 // pred_region
      _
    $region13: #{prompt_learner_forward.1} parent=1 // pred_fallthru
      _
    %v15 = vld [vmem:[%s0] sm:$0xf]
    %v16 = vld [vmem:[%s1] sm:$0x1]
    %v17 = vld [vmem:[%s1 + $0x1] sm:$0x1]
    %v18 = vld [vmem:[%s1 + $0x2] sm:$0x1]
    %v19 = vld [vmem:[%s1 + $0x3] sm:$0x1]
    %v20 = vld [vmem:[%s1 + $0x4] sm:$0x1]
    %v21 = vld [vmem:[%s1 + $0x5] sm:$0x1]
    %v22 = vld [vmem:[%s1 + $0x6] sm:$0x1]
    %v23 = vld [vmem:[%s1 + $0x7] sm:$0x1]
    %v24 = vld [vmem:[%s1 + $0x8] sm:$0x1]
    %v25 = vld [vmem:[%s1 + $0x9] sm:$0x1]
    %v26 = vld [vmem:[%s1 + $0xa] sm:$0x1]
    %v27 = vld [vmem:[%s1 + $0xb] sm:$0x1]
    %v28 = vld [vmem:[%s1 + $0xc] sm:$0x1]
    %v29 = vld [vmem:[%s1 + $0xd] sm:$0x1]
    %v30 = vld [vmem:[%s1 + $0xe] sm:$0x1]
    %v31 = vld [vmem:[%s1 + $0xf] sm:$0x1]
    %v32 = vld [vmem:[%s2] sm:$0xff]
    %v33 = vld [vmem:[%s2 + $0x8] sm:$0x7]
    %v34 = vld [vmem:[%s2 + $0x10] sm:$0xff]
    %v35 = vld [vmem:[%s2 + $0x18] sm:$0x7]
    %v36 = vld [vmem:[%s2 + $0x20] sm:$0xff]
    %v37 = vld [vmem:[%s2 + $0x28] sm:$0x7]
    %v38 = vld [vmem:[%s2 + $0x30] sm:$0xff]
    %v39 = vld [vmem:[%s2 + $0x38] sm:$0x7]
    %v40 = vld [vmem:[%s2 + $0x40] sm:$0xff]
    %v41 = vld [vmem:[%s2 + $0x48] sm:$0x7]
    %v42 = vld [vmem:[%s2 + $0x50] sm:$0xff]
    %v43 = vld [vmem:[%s2 + $0x58] sm:$0x7]
    %v44 = vld [vmem:[%s2 + $0x60] sm:$0xff]
    %v45 = vld [vmem:[%s2 + $0x68] sm:$0x7]
    %v46 = vld [vmem:[%s2 + $0x70] sm:$0xff]
    %v47 = vld [vmem:[%s2 + $0x78] sm:$0x7]
    %v48 = vld [vmem:[%s2 + $0x80] sm:$0xff]
    %v49 = vld [vmem:[%s2 + $0x88] sm:$0x7]
    %v50 = vld [vmem:[%s2 + $0x90] sm:$0xff]
    %v51 = vld [vmem:[%s2 + $0x98] sm:$0x7]
    %v52 = vld [vmem:[%s2 + $0xa0] sm:$0xff]
    %v53 = vld [vmem:[%s2 + $0xa8] sm:$0x7]
    %v54 = vld [vmem:[%s2 + $0xb0] sm:$0xff]
    %v55 = vld [vmem:[%s2 + $0xb8] sm:$0x7]
    %v56 = vld [vmem:[%s2 + $0xc0] sm:$0xff]
    %v57 = vld [vmem:[%s2 + $0xc8] sm:$0x7]
    %v58 = vld [vmem:[%s2 + $0xd0] sm:$0xff]
    %v59 = vld [vmem:[%s2 + $0xd8] sm:$0x7]
    %v60 = vld [vmem:[%s2 + $0xe0] sm:$0xff]
    %v61 = vld [vmem:[%s2 + $0xe8] sm:$0x7]
    %v62 = vld [vmem:[%s2 + $0xf0] sm:$0xff]
    %v63 = vld [vmem:[%s2 + $0xf8] sm:$0x7]
    %v65 = vrot.slane %v15, 7
    %vm99 = vcmask 1044480
    %v100 = vrot.slane %v32, 3
    %v101 = vrot.slane %v33, 3
    %v102 = vsel %vm99, %v100, %v101
    %v103 = vrot.slane %v34, 3
    %v104 = vrot.slane %v35, 3
    %v105 = vsel %vm99, %v103, %v104
    %v106 = vrot.slane %v36, 3
    %v107 = vrot.slane %v37, 3
    %v108 = vsel %vm99, %v106, %v107
    %v109 = vrot.slane %v38, 3
    %v110 = vrot.slane %v39, 3
    %v111 = vsel %vm99, %v109, %v110
    %v112 = vrot.slane %v40, 3
    %v113 = vrot.slane %v41, 3
    %v114 = vsel %vm99, %v112, %v113
    %v115 = vrot.slane %v42, 3
    %v116 = vrot.slane %v43, 3
    %v117 = vsel %vm99, %v115, %v116
    %v118 = vrot.slane %v44, 3
    %v119 = vrot.slane %v45, 3
    %v120 = vsel %vm99, %v118, %v119
    %v121 = vrot.slane %v46, 3
    %v122 = vrot.slane %v47, 3
    %v123 = vsel %vm99, %v121, %v122
    %v124 = vrot.slane %v48, 3
    %v125 = vrot.slane %v49, 3
    %v126 = vsel %vm99, %v124, %v125
    %v127 = vrot.slane %v50, 3
    %v128 = vrot.slane %v51, 3
    %v129 = vsel %vm99, %v127, %v128
    %v130 = vrot.slane %v52, 3
    %v131 = vrot.slane %v53, 3
    %v132 = vsel %vm99, %v130, %v131
    %v133 = vrot.slane %v54, 3
    %v134 = vrot.slane %v55, 3
    %v135 = vsel %vm99, %v133, %v134
    %v136 = vrot.slane %v56, 3
    %v137 = vrot.slane %v57, 3
    %v138 = vsel %vm99, %v136, %v137
    %v139 = vrot.slane %v58, 3
    %v140 = vrot.slane %v59, 3
    %v141 = vsel %vm99, %v139, %v140
    %v142 = vrot.slane %v60, 3
    %v143 = vrot.slane %v61, 3
    %v144 = vsel %vm99, %v142, %v143
    %v145 = vrot.slane %v62, 3
    %v146 = vrot.slane %v63, 3
    %v147 = vsel %vm99, %v145, %v146
    %vm180 = vcmask 1040384
    %v181 = vsel %vm180, %v16, %v65
    %v182 = vsel %vm180, %v17, %v65
    %v183 = vsel %vm180, %v18, %v65
    %v184 = vsel %vm180, %v19, %v65
    %v185 = vsel %vm180, %v20, %v65
    %v186 = vsel %vm180, %v21, %v65
    %v187 = vsel %vm180, %v22, %v65
    %v188 = vsel %vm180, %v23, %v65
    %v189 = vsel %vm180, %v24, %v65
    %v190 = vsel %vm180, %v25, %v65
    %v191 = vsel %vm180, %v26, %v65
    %v192 = vsel %vm180, %v27, %v65
    %v193 = vsel %vm180, %v28, %v65
    %v194 = vsel %vm180, %v29, %v65
    %v195 = vsel %vm180, %v30, %v65
    %v196 = vsel %vm180, %v31, %v65
    %v197 = vsel %vm99, %v181, %v100
    %v198 = vsel %vm99, %v182, %v103
    %v199 = vsel %vm99, %v183, %v106
    %v200 = vsel %vm99, %v184, %v109
    %v201 = vsel %vm99, %v185, %v112
    %v202 = vsel %vm99, %v186, %v115
    %v203 = vsel %vm99, %v187, %v118
    %v204 = vsel %vm99, %v188, %v121
    %v205 = vsel %vm99, %v189, %v124
    %v206 = vsel %vm99, %v190, %v127
    %v207 = vsel %vm99, %v191, %v130
    %v208 = vsel %vm99, %v192, %v133
    %v209 = vsel %vm99, %v193, %v136
    %v210 = vsel %vm99, %v194, %v139
    %v211 = vsel %vm99, %v195, %v142
    %v212 = vsel %vm99, %v196, %v145
    %213 = vst [vmem:[#allocation2] sm:$0xff] %v197
    %214 = vst [vmem:[#allocation2 + $0x8] sm:$0xff] %v102
    %215 = vst [vmem:[#allocation2 + $0x10] sm:$0xff] %v198
    %216 = vst [vmem:[#allocation2 + $0x18] sm:$0xff] %v105
    %217 = vst [vmem:[#allocation2 + $0x20] sm:$0xff] %v199
    %218 = vst [vmem:[#allocation2 + $0x28] sm:$0xff] %v108
    %219 = vst [vmem:[#allocation2 + $0x30] sm:$0xff] %v200
    %220 = vst [vmem:[#allocation2 + $0x38] sm:$0xff] %v111
    %221 = vst [vmem:[#allocation2 + $0x40] sm:$0xff] %v201
    %222 = vst [vmem:[#allocation2 + $0x48] sm:$0xff] %v114
    %223 = vst [vmem:[#allocation2 + $0x50] sm:$0xff] %v202
    %224 = vst [vmem:[#allocation2 + $0x58] sm:$0xff] %v117
    %225 = vst [vmem:[#allocation2 + $0x60] sm:$0xff] %v203
    %226 = vst [vmem:[#allocation2 + $0x68] sm:$0xff] %v120
    %227 = vst [vmem:[#allocation2 + $0x70] sm:$0xff] %v204
    %228 = vst [vmem:[#allocation2 + $0x78] sm:$0xff] %v123
    %229 = vst [vmem:[#allocation2 + $0x80] sm:$0xff] %v205
    %230 = vst [vmem:[#allocation2 + $0x88] sm:$0xff] %v126
    %231 = vst [vmem:[#allocation2 + $0x90] sm:$0xff] %v206
    %232 = vst [vmem:[#allocation2 + $0x98] sm:$0xff] %v129
    %233 = vst [vmem:[#allocation2 + $0xa0] sm:$0xff] %v207
    %234 = vst [vmem:[#allocation2 + $0xa8] sm:$0xff] %v132
    %235 = vst [vmem:[#allocation2 + $0xb0] sm:$0xff] %v208
    %236 = vst [vmem:[#allocation2 + $0xb8] sm:$0xff] %v135
    %237 = vst [vmem:[#allocation2 + $0xc0] sm:$0xff] %v209
    %238 = vst [vmem:[#allocation2 + $0xc8] sm:$0xff] %v138
    %239 = vst [vmem:[#allocation2 + $0xd0] sm:$0xff] %v210
    %240 = vst [vmem:[#allocation2 + $0xd8] sm:$0xff] %v141
    %241 = vst [vmem:[#allocation2 + $0xe0] sm:$0xff] %v211
    %242 = vst [vmem:[#allocation2 + $0xe8] sm:$0xff] %v144
    %243 = vst [vmem:[#allocation2 + $0xf0] sm:$0xff] %v212
    %244 = vst [vmem:[#allocation2 + $0xf8] sm:$0xff] %v147
    // Predicated region
    $region14: #{prompt_learner_forward.1} parent=1 // pred_check
      _
    $region15: #{prompt_learner_forward.1} parent=1 // pred_check_branch
      %246 = sbr.rel (0) target = $region17
    $region16: #{prompt_learner_forward.1} parent=1 // pred_region
      %s248 = ssub.s32 4096, 4096
      %249 = vsyncadd [#allocation3], %s248
      %s250 = sshll.u32 [#allocation2], 4
      %s251 = int_to_ptr.vmem [resolvable:$true] %s250
      %256 = dma.vmem_to_hbm [thread:$0]  %s251, 4096, %s3, [#allocation3], 128, 128, 8
    $region17: #{prompt_learner_forward.1} parent=1 // pred_fallthru
      _
    // Predicated region
    $region18: #{prompt_learner_forward.1} parent=1 // pred_check
      _
    $region19: #{prompt_learner_forward.1} parent=1 // pred_check_branch
      %258 = sbr.rel (0) target = $region21
    $region20: #{prompt_learner_forward.1} parent=1 // pred_region
      %259 = dma.done [#allocation3], 4096
    $region21: #{prompt_learner_forward.1} parent=1 // pred_fallthru
      _
    %260 = vsyncpa [#allocation3], 1

</llo_original>
